<compile_context>
chip_gen: v6e
topology: v6e:2x2x1
jax: 0.10.0
libtpu: 0.0.40
codegen_flags: <defaults>
</compile_context>

<pallas_src>
import jax
import jax.numpy as jnp
from jax import lax
from jax.experimental import pallas as pl
from jax.experimental.pallas import tpu as pltpu


def _attn_context_kernel(x_ref, w_ref, b_ref, ctx_ref):
    """Per-batch hot path: fused 1x1 convs, softmax mask, reassociated context."""
    X = x_ref[0]                                                      # (C, HW)
    C = X.shape[0]

    # Fused 1x1 convs: rows 0..C-1 = conv_first, row C = conv_mask.
    FL = jnp.dot(w_ref[...], X, preferred_element_type=jnp.float32) + b_ref[...]
    F = FL[:C]                                                        # (C, HW)
    logits = FL[C:]                                                   # (1, HW)

    # Softmax over spatial positions.
    p = jnp.exp(logits - jnp.max(logits, axis=-1, keepdims=True))
    m = p / jnp.sum(p, axis=-1, keepdims=True)                        # (1, HW)

    # Reassociated context: ctx = F^T (X @ m) instead of (F^T X) @ m.
    v = jnp.sum(X * m, axis=1, keepdims=True)                         # (C, 1) = X @ m
    ctx_ref[0] = jnp.sum(F * v, axis=0, keepdims=True)                # (1, HW)


def _bn_sigmoid_scale_kernel(ab_ref, ctx_ref, x_ref, out_ref):
    """sigmoid(a * ctx + b) * x, with (a, b) the pre-folded BN affine (SMEM)."""
    a = ab_ref[0]
    b = ab_ref[1]
    s = jax.nn.sigmoid(ctx_ref[...] * a + b)                          # (BB, 1, THW)
    out_ref[...] = x_ref[...] * s                                     # broadcast over C


def space_att_forward(x, params):
    B, C, H, W = x.shape
    HW = H * W
    x_flat = x.reshape(B, C, HW).astype(jnp.float32)

    wf, bf, wm, bm = params["wf"], params["bf"], params["wm"], params["bm"]
    gamma = params["gamma"][0, 0]
    beta = params["beta"][0, 0]

    # Stack conv_first (C rows) and conv_mask (1 row) into one matmul weight.
    w_fused = jnp.concatenate([wf, wm], axis=0)                       # (C+1, C)
    b_fused = jnp.concatenate([bf, bm], axis=0)                       # (C+1, 1)

    # Kernel 1: per-batch attention context (grid over batch).
    ctx = pl.pallas_call(
        _attn_context_kernel,
        out_shape=jax.ShapeDtypeStruct((B, 1, HW), jnp.float32),
        grid_spec=pltpu.PrefetchScalarGridSpec(
            num_scalar_prefetch=0,
            grid=(B,),
            in_specs=[
                pl.BlockSpec((1, C, HW), lambda b: (b, 0, 0)),        # x
                pl.BlockSpec((C + 1, C), lambda b: (0, 0)),           # fused conv weight
                pl.BlockSpec((C + 1, 1), lambda b: (0, 0)),           # fused conv bias
            ],
            out_specs=pl.BlockSpec((1, 1, HW), lambda b: (b, 0, 0)),
        ),
        compiler_params=pltpu.CompilerParams(
            dimension_semantics=("parallel",)),
    )(x_flat, w_fused, b_fused)

    # BN (train mode) batch statistics on the tiny (B, 1, HW) context, folded
    # with gamma/beta into a single affine: bn(ctx) = a * ctx + b.
    mean = jnp.mean(ctx)
    var = jnp.mean(jnp.square(ctx - mean))                            # biased variance
    a = gamma * lax.rsqrt(var + 1e-5)
    b = beta - mean * a
    ab = jnp.stack([a, b]).astype(jnp.float32)                        # (2,) SMEM scalars

    # Kernel 2 tiling: multiple batches per step (fill sublanes at small C)
    # and an HW tile axis sized for VMEM at large HW.
    BB = 2 if (B % 2 == 0 and 2 * C <= 8) else 1
    if HW % 128 == 0:
        thw = min(HW, 2048)
        while HW % thw:
            thw //= 2
    else:
        thw = HW

    out_flat = pl.pallas_call(
        _bn_sigmoid_scale_kernel,
        out_shape=jax.ShapeDtypeStruct((B, C, HW), jnp.float32),
        grid_spec=pltpu.PrefetchScalarGridSpec(
            num_scalar_prefetch=0,
            grid=(B // BB, HW // thw),
            in_specs=[
                pl.BlockSpec(memory_space=pltpu.MemorySpace.SMEM),        # (a, b) scalars
                pl.BlockSpec((BB, 1, thw), lambda i, j: (i, 0, j)),       # ctx tile
                pl.BlockSpec((BB, C, thw), lambda i, j: (i, 0, j)),       # x tile
            ],
            out_specs=pl.BlockSpec((BB, C, thw), lambda i, j: (i, 0, j)),
        ),
        compiler_params=pltpu.CompilerParams(
            dimension_semantics=("parallel", "parallel")),
    )(ab, ctx, x_flat)

    return out_flat.reshape(B, C, H, W)


def space_att_reference(x, params):
    """Pure-JAX reference mirroring the PyTorch forward (train-mode BN),
    including the explicit (HW, HW) second_x matrix — validates the
    reassociation used in the kernel."""
    B, C, H, W = x.shape
    HW = H * W
    X = x.reshape(B, C, HW)
    F = jnp.einsum("oc,bch->boh", params["wf"], X) + params["bf"].reshape(1, C, 1)
    logits = jnp.einsum("oc,bch->boh", params["wm"], X) + params["bm"].reshape(1, 1, 1)
    m = jax.nn.softmax(logits, axis=-1)[:, 0, :]                      # (B, HW)
    second = jnp.einsum("bcp,bcq->bpq", F, X)                         # (B, HW, HW)
    ctx = jnp.einsum("bpq,bq->bp", second, m)                         # (B, HW)
    mean = jnp.mean(ctx)
    var = jnp.mean((ctx - mean) ** 2)
    norm = (ctx - mean) / jnp.sqrt(var + 1e-5)
    s = jax.nn.sigmoid(norm * params["gamma"][0, 0] + params["beta"][0, 0])
    out = s[:, None, :] * X
    return out.reshape(B, C, H, W)


if __name__ == "__main__":
    B, C, H, W = 2, 4, 16, 16

    key = jax.random.PRNGKey(0)
    k1, k2, k3, k4, kx = jax.random.split(key, 5)

    params = {
        "wf": jax.random.normal(k1, (C, C), jnp.float32) * 0.1,       # conv_first weight (1x1)
        "bf": jax.random.normal(k2, (C, 1), jnp.float32) * 0.1,       # conv_first bias
        "wm": jax.random.normal(k3, (1, C), jnp.float32) * 0.1,       # conv_mask weight (1x1)
        "bm": jax.random.normal(k4, (1, 1), jnp.float32) * 0.1,       # conv_mask bias
        "gamma": jnp.ones((1, 1), jnp.float32),                       # BN weight (default init)
        "beta": jnp.zeros((1, 1), jnp.float32),                       # BN bias (default init)
    }

    x = jax.random.normal(kx, (B, C, H, W), jnp.float32)

    out = jax.jit(space_att_forward)(x, params)
    out = jax.block_until_ready(out)

    ref = space_att_reference(x, params)
    assert out.shape == (B, C, H, W)
    assert jnp.allclose(out, ref, rtol=1e-4, atol=1e-5), "mismatch vs reference"

    print("KERNEL_OK")
</pallas_src>

<mosaic_0001>
module attributes {stable_mosaic.version = 11 : i64} {
  func.func @_bn_sigmoid_scale_kernel(%arg0: i32, %arg1: i32, %arg2: memref<2xf32, #tpu.memory_space<smem>>, %arg3: memref<2x1x256xf32, #tpu.memory_space<vmem>>, %arg4: memref<2x4x256xf32, #tpu.memory_space<vmem>>, %arg5: memref<2x4x256xf32, #tpu.memory_space<vmem>>) attributes {dimension_semantics = [#tpu.dimension_semantics<parallel>, #tpu.dimension_semantics<parallel>], iteration_bounds = array<i64: 1, 1>, scalar_prefetch = 0 : i64, scratch_operands = 0 : i64, tpu.core_type = #tpu.core_type<tc>, window_params = [{transform_indices = @transform_0, window_bounds = array<i64: 2>}, {transform_indices = @transform_1, window_bounds = array<i64: 2, 1, 256>}, {transform_indices = @transform_2, window_bounds = array<i64: 2, 4, 256>}, {transform_indices = @transform_3, window_bounds = array<i64: 2, 4, 256>}]} {
    %c0 = arith.constant 0 : index
    %0 = memref.load %arg2[%c0] : memref<2xf32, #tpu.memory_space<smem>>
    %c1 = arith.constant 1 : index
    %1 = memref.load %arg2[%c1] : memref<2xf32, #tpu.memory_space<smem>>
    %c0_0 = arith.constant 0 : index
    %c0_1 = arith.constant 0 : index
    %c0_2 = arith.constant 0 : index
    %2 = vector.load %arg3[%c0_0, %c0_1, %c0_2] : memref<2x1x256xf32, #tpu.memory_space<vmem>>, vector<2x1x256xf32>
    %3 = vector.broadcast %0 : f32 to vector<2x1x256xf32>
    %4 = arith.mulf %2, %3 : vector<2x1x256xf32>
    %5 = vector.broadcast %1 : f32 to vector<2x1x256xf32>
    %6 = arith.addf %4, %5 : vector<2x1x256xf32>
    %7 = arith.negf %6 : vector<2x1x256xf32>
    %8 = math.exp %7 : vector<2x1x256xf32>
    %cst = arith.constant 1.000000e+00 : f32
    %9 = vector.broadcast %cst : f32 to vector<2x1x256xf32>
    %10 = arith.addf %9, %8 : vector<2x1x256xf32>
    %11 = arith.divf %9, %10 : vector<2x1x256xf32>
    %c0_3 = arith.constant 0 : index
    %c0_4 = arith.constant 0 : index
    %c0_5 = arith.constant 0 : index
    %12 = vector.load %arg4[%c0_3, %c0_4, %c0_5] : memref<2x4x256xf32, #tpu.memory_space<vmem>>, vector<2x4x256xf32>
    %13 = vector.broadcast %11 : vector<2x1x256xf32> to vector<2x4x256xf32>
    %14 = arith.mulf %12, %13 : vector<2x4x256xf32>
    %c0_6 = arith.constant 0 : index
    %c0_7 = arith.constant 0 : index
    %c0_8 = arith.constant 0 : index
    %15 = vector.load %arg5[%c0_6, %c0_7, %c0_8] : memref<2x4x256xf32, #tpu.memory_space<vmem>>, vector<2x4x256xf32>
    tpu.vector_store %arg5[%c0_6, %c0_7, %c0_8], %14 {strides = array<i32>} : memref<2x4x256xf32, #tpu.memory_space<vmem>>, vector<2x4x256xf32>,
    return
  }
  func.func @transform_0(%arg0: i32, %arg1: i32) -> i32 {
    %c0_i32 = arith.constant 0 : i32
    %c0_i32_0 = arith.constant 0 : i32
    return %c0_i32 : i32
  }
  func.func @transform_1(%arg0: i32, %arg1: i32) -> (i32, i32, i32) {
    %c0_i32 = arith.constant 0 : i32
    %c0_i32_0 = arith.constant 0 : i32
    return %arg0, %c0_i32, %arg1 : i32, i32, i32
  }
  func.func @transform_2(%arg0: i32, %arg1: i32) -> (i32, i32, i32) {
    %c0_i32 = arith.constant 0 : i32
    %c0_i32_0 = arith.constant 0 : i32
    return %arg0, %c0_i32, %arg1 : i32, i32, i32
  }
  func.func @transform_3(%arg0: i32, %arg1: i32) -> (i32, i32, i32) {
    %c0_i32 = arith.constant 0 : i32
    %c0_i32_0 = arith.constant 0 : i32
    return %arg0, %c0_i32, %arg1 : i32, i32, i32
  }
}

module attributes {stable_mosaic.version = 11 : i64} {
  func.func @_attn_context_kernel(%arg0: i32, %arg1: memref<1x4x256xf32, #tpu.memory_space<vmem>>, %arg2: memref<5x4xf32, #tpu.memory_space<vmem>>, %arg3: memref<5x1xf32, #tpu.memory_space<vmem>>, %arg4: memref<1x1x256xf32, #tpu.memory_space<vmem>>) attributes {dimension_semantics = [#tpu.dimension_semantics<parallel>], iteration_bounds = array<i64: 2>, scalar_prefetch = 0 : i64, scratch_operands = 0 : i64, tpu.core_type = #tpu.core_type<tc>, window_params = [{transform_indices = @transform_0, window_bounds = array<i64: 1, 4, 256>}, {pipeline_mode = #tpu.pipeline_mode<synchronous>, transform_indices = @transform_1, window_bounds = array<i64: 5, 4>}, {pipeline_mode = #tpu.pipeline_mode<synchronous>, transform_indices = @transform_2, window_bounds = array<i64: 5, 1>}, {transform_indices = @transform_3, window_bounds = array<i64: 1, 1, 256>}]} {
    %c0 = arith.constant 0 : index
    %c0_0 = arith.constant 0 : index
    %c0_1 = arith.constant 0 : index
    %0 = vector.load %arg1[%c0, %c0_0, %c0_1] : memref<1x4x256xf32, #tpu.memory_space<vmem>>, vector<1x4x256xf32>
    %1 = vector.shape_cast %0 : vector<1x4x256xf32> to vector<4x256xf32>
    %c0_2 = arith.constant 0 : index
    %c0_3 = arith.constant 0 : index
    %2 = vector.load %arg2[%c0_2, %c0_3] : memref<5x4xf32, #tpu.memory_space<vmem>>, vector<5x4xf32>
    %cst = arith.constant dense<0.000000e+00> : vector<5x256xf32>
    %3 = tpu.matmul %2, %1, %cst {dimension_numbers = #tpu.dot_dimension_numbers<[1], [0], [0], [1], [0, 0, 1, 1], [], []>} : vector<5x4xf32>, vector<4x256xf32>, vector<5x256xf32> -> vector<5x256xf32>
    %c0_4 = arith.constant 0 : index
    %c0_5 = arith.constant 0 : index
    %4 = vector.load %arg3[%c0_4, %c0_5] : memref<5x1xf32, #tpu.memory_space<vmem>>, vector<5x1xf32>
    %5 = vector.broadcast %4 : vector<5x1xf32> to vector<5x256xf32>
    %6 = arith.addf %3, %5 : vector<5x256xf32>
    %7 = vector.extract_strided_slice %6 {offsets = [0, 0], sizes = [4, 256], strides = [1, 1]} : vector<5x256xf32> to vector<4x256xf32>
    %8 = vector.extract_strided_slice %6 {offsets = [4, 0], sizes = [1, 256], strides = [1, 1]} : vector<5x256xf32> to vector<1x256xf32>
    %cst_6 = arith.constant dense<0xFF800000> : vector<1xf32>
    %9 = vector.multi_reduction <maximumf>, %8, %cst_6 [1] : vector<1x256xf32> to vector<1xf32>
    %10 = vector.shape_cast %9 : vector<1xf32> to vector<1x1xf32>
    %11 = vector.broadcast %10 : vector<1x1xf32> to vector<1x256xf32>
    %12 = arith.subf %8, %11 : vector<1x256xf32>
    %13 = math.exp %12 : vector<1x256xf32>
    %cst_7 = arith.constant dense<0.000000e+00> : vector<1xf32>
    %14 = vector.multi_reduction <add>, %13, %cst_7 [1] : vector<1x256xf32> to vector<1xf32>
    %15 = vector.shape_cast %14 : vector<1xf32> to vector<1x1xf32>
    %16 = vector.broadcast %15 : vector<1x1xf32> to vector<1x256xf32>
    %17 = arith.divf %13, %16 : vector<1x256xf32>
    %18 = vector.broadcast %17 : vector<1x256xf32> to vector<4x256xf32>
    %19 = arith.mulf %1, %18 : vector<4x256xf32>
    %cst_8 = arith.constant dense<0.000000e+00> : vector<4xf32>
    %20 = vector.multi_reduction <add>, %19, %cst_8 [1] : vector<4x256xf32> to vector<4xf32>
    %21 = vector.shape_cast %20 : vector<4xf32> to vector<4x1xf32>
    %22 = vector.broadcast %21 : vector<4x1xf32> to vector<4x256xf32>
    %23 = arith.mulf %7, %22 : vector<4x256xf32>
    %cst_9 = arith.constant dense<0.000000e+00> : vector<256xf32>
    %24 = vector.multi_reduction <add>, %23, %cst_9 [0] : vector<4x256xf32> to vector<256xf32>
    %25 = vector.shape_cast %24 : vector<256xf32> to vector<1x256xf32>
    %c0_10 = arith.constant 0 : index
    %c0_11 = arith.constant 0 : index
    %c0_12 = arith.constant 0 : index
    %26 = vector.load %arg4[%c0_10, %c0_11, %c0_12] : memref<1x1x256xf32, #tpu.memory_space<vmem>>, vector<1x1x256xf32>
    %27 = vector.shape_cast %26 : vector<1x1x256xf32> to vector<1x256xf32>
    %28 = vector.shape_cast %25 : vector<1x256xf32> to vector<1x1x256xf32>
    tpu.vector_store %arg4[%c0_10, %c0_11, %c0_12], %28 {strides = array<i32>} : memref<1x1x256xf32, #tpu.memory_space<vmem>>, vector<1x1x256xf32>,
    return
  }
  func.func @transform_0(%arg0: i32) -> (i32, i32, i32) {
    %c0_i32 = arith.constant 0 : i32
    %c0_i32_0 = arith.constant 0 : i32
    %c0_i32_1 = arith.constant 0 : i32
    return %arg0, %c0_i32, %c0_i32_0 : i32, i32, i32
  }
  func.func @transform_1(%arg0: i32) -> (i32, i32) {
    %c0_i32 = arith.constant 0 : i32
    %c0_i32_0 = arith.constant 0 : i32
    %c0_i32_1 = arith.constant 0 : i32
    return %c0_i32, %c0_i32_0 : i32, i32
  }
  func.func @transform_2(%arg0: i32) -> (i32, i32) {
    %c0_i32 = arith.constant 0 : i32
    %c0_i32_0 = arith.constant 0 : i32
    %c0_i32_1 = arith.constant 0 : i32
    return %c0_i32, %c0_i32_0 : i32, i32
  }
  func.func @transform_3(%arg0: i32) -> (i32, i32, i32) {
    %c0_i32 = arith.constant 0 : i32
    %c0_i32_0 = arith.constant 0 : i32
    %c0_i32_1 = arith.constant 0 : i32
    return %arg0, %c0_i32, %c0_i32_0 : i32, i32, i32
  }
}

</mosaic_0001>

<llo_original>
// kernel: space_att_forward.3
$region0: #{space_att_forward.3}
  #allocation0 [shape = 'u32[]', space=smem, size = 0x4, offset = 0x4, fixed_abs, tag = 'smem constant byte address 0x4 - core index']
  #allocation1 [shape = 'u32[144,128]{1,0:T(1,128)}', space=vmem, size = 0x12000, scoped, tag = 'internal scratch']
  %s0 = inlined_call_operand.vmem [shape: f32[2], index: 0, kind: input, shape index: {}]
  %s1 = inlined_call_operand.vmem [shape: f32[2,1,256], index: 1, kind: input, shape index: {}]
  %s2 = inlined_call_operand.vmem [shape: f32[2,4,256], index: 2, kind: input, shape index: {}]
  %s3 = inlined_call_operand.vmem [shape: f32[2,4,256], index: 3, kind: output, shape index: {}]
  %s4 = sld [smem:[#allocation0]]
  $region26: #{space_att_forward.3} parent=0
    _
  %s6 = ssub.s32 1, %s4
  %s7 = scalar_select 0, %s6, %s4
  $region1: #{space_att_forward.3} parent=0
    #allocation2 [shape = 'u8[512]{0}', space=smem, size = 0x200, scoped, tag = 'input window, operand 0, single buffered']
    #allocation3 [shape = 's32[1]{0}', space=sflag, size = 0x4, scoped, tag = 'scoped memory for space_att_forward.3']
    %8 = vsyncpa [#allocation3], 0
    // Predicated region
    $region2: #{space_att_forward.3} parent=1 // pred_check
      _
    $region3: #{space_att_forward.3} parent=1 // pred_check_branch
      %10 = sbr.rel (0) target = $region5
    $region4: #{space_att_forward.3} parent=1 // pred_region
      %s12 = ssub.s32 16, 16
      %13 = vsyncadd [#allocation3], %s12
      %s15 = sshll.u32 %s0, 4
      %s16 = int_to_ptr.vmem [resolvable:$true] %s15
      %18 = dma.vmem_to_smem %s16, 16, [#allocation2], [#allocation3]
    $region5: #{space_att_forward.3} parent=1 // pred_fallthru
      _
    // Predicated region
    $region6: #{space_att_forward.3} parent=1 // pred_check
      _
    $region7: #{space_att_forward.3} parent=1 // pred_check_branch
      %20 = sbr.rel (0) target = $region9
    $region8: #{space_att_forward.3} parent=1 // pred_region
      _
    $region9: #{space_att_forward.3} parent=1 // pred_fallthru
      _
    // Predicated region
    $region10: #{space_att_forward.3} parent=1 // pred_check
      _
    $region11: #{space_att_forward.3} parent=1 // pred_check_branch
      %22 = sbr.rel (0) target = $region13
    $region12: #{space_att_forward.3} parent=1 // pred_region
      _
    $region13: #{space_att_forward.3} parent=1 // pred_fallthru
      _
    // Predicated region
    $region14: #{space_att_forward.3} parent=1 // pred_check
      _
    $region15: #{space_att_forward.3} parent=1 // pred_check_branch
      %24 = sbr.rel (0) target = $region17
    $region16: #{space_att_forward.3} parent=1 // pred_region
      %25 = dma.done [#allocation3], 16
    $region17: #{space_att_forward.3} parent=1 // pred_fallthru
      _
    %26 = sfence
    %s27 = sld [smem:[#allocation2]]
    %s28 = sld [smem:[#allocation2 + $0x1]]
    %v29 = vld [vmem:[%s1] sm:$0x3]
    %v30 = vld [vmem:[%s1 + $0x2] sm:$0x3]
    %v31 = vstv %s27
    %v32 = vmul.f32 %v29, %v31
    %v33 = vmul.f32 %v30, %v31
    %v34 = vstv %s28
    %v35 = vadd.f32 %v32, %v34
    %v36 = vadd.f32 %v33, %v34
    %v37 = vxor.u32 %v35, 2147483648
    %v38 = vxor.u32 %v36, 2147483648
    %v39 = vmul.f32 %v37, 1.442695
    %v40 = vpow.pop %v39
    %v41 = vmul.f32 %v38, 1.442695
    %v42 = vpow.pop %v41
    %v43 = vadd.f32 %v40, 1.0
    %v44 = vadd.f32 %v42, 1.0
    %v45 = vrcp.pop %v43
    %v46 = vmul.f32 1.0, %v45
    %v47 = vrcp.pop %v44
    %v48 = vmul.f32 1.0, %v47
    %v49 = vld [vmem:[%s2] sm:$0xff]
    %v50 = vld [vmem:[%s2 + $0x8] sm:$0xff]
    %v53 = vlaneseq
    %v54 = vshrl.u32 %v53, 7
    %v55 = vsub.s32 0, %v54
    %v56 = vrot.slane %v46, %v55
    %v57 = vlaneseq
    %v58 = vshrl.u32 %v57, 7
    %v59 = vsub.s32 1, %v58
    %v60 = vrot.slane %v46, %v59
    %v61 = vlaneseq
    %v62 = vshrl.u32 %v61, 7
    %v63 = vsub.s32 0, %v62
    %v64 = vrot.slane %v48, %v63
    %v65 = vlaneseq
    %v66 = vshrl.u32 %v65, 7
    %v67 = vsub.s32 1, %v66
    %v68 = vrot.slane %v48, %v67
    %v69 = vcombine.low %v56, %v60
    %v70 = vcombine.low %v64, %v68
    %v73 = vmul.f32 %v49, %v69
    %v74 = vmul.f32 %v50, %v70
    %75 = vst [vmem:[%s3] sm:$0xff] %v73
    %76 = vst [vmem:[%s3 + $0x8] sm:$0xff] %v74
    // Predicated region
    $region18: #{space_att_forward.3} parent=1 // pred_check
      _
    $region19: #{space_att_forward.3} parent=1 // pred_check_branch
      %78 = sbr.rel (0) target = $region21
    $region20: #{space_att_forward.3} parent=1 // pred_region
      _
    $region21: #{space_att_forward.3} parent=1 // pred_fallthru
      _
    // Predicated region
    $region22: #{space_att_forward.3} parent=1 // pred_check
      _
    $region23: #{space_att_forward.3} parent=1 // pred_check_branch
      %80 = sbr.rel (0) target = $region25
    $region24: #{space_att_forward.3} parent=1 // pred_region
      _
    $region25: #{space_att_forward.3} parent=1 // pred_fallthru
      _
    %81 = vsyncpa [#allocation3], 1

// kernel: space_att_forward.2
$region0: #{space_att_forward.2}
  #allocation0 [shape = 'u32[]', space=smem, size = 0x4, offset = 0x4, fixed_abs, tag = 'smem constant byte address 0x4 - core index']
  #allocation1 [shape = 'u32[144,128]{1,0:T(1,128)}', space=vmem, size = 0x12000, scoped, tag = 'internal scratch']
  %s0 = inlined_call_operand.vmem [shape: f32[2,4,256], index: 0, kind: input, shape index: {}]
  %s1 = inlined_call_operand.vmem [shape: f32[5,4], index: 1, kind: input, shape index: {}]
  %s2 = inlined_call_operand.vmem [shape: f32[5,1], index: 2, kind: input, shape index: {}]
  %s3 = inlined_call_operand.vmem [shape: f32[2,1,256], index: 3, kind: output, shape index: {}]
  %s4 = sld [smem:[#allocation0]]
  $region45: #{space_att_forward.2} parent=0
    _
  %s6 = ssub.s32 1, %s4
  %s7 = scalar_select 0, %s6, %s4
  loop: start=0, step=1, limit=4
  $region2: #{space_att_forward.2} parent=0 // loop_pre_header
    _
  $region3: #{space_att_forward.2} parent=0 // loop_header
    %s9 = sphi 0, %s13
    %p10 = scmp.ge.s32.totalorder %s9, 4
    %s19 = sphi 0, %s21
    %s22 = sphi 0, %s19
    %s23 = sphi 0, %s22
    %s39 = sphi 0, %s23
    %s43 = sphi 0, %s43
    %s45 = sphi 0, %s43
    %s46 = sphi 0, %s45
    %s60 = sphi 0, %s46
    %s64 = sphi 0, %s64
    %s66 = sphi 0, %s64
    %s67 = sphi 0, %s66
    %s81 = sphi 0, %s67
    %s87 = sphi 0, %s89
    %s90 = sphi 0, %s87
    %s91 = sphi 0, %s90
    %s107 = sphi 0, %s91
  $region4: #{space_att_forward.2} parent=0 // loop_header_branch
    %12 = sbr.rel (%p10) target = $region8
  $region5: #{space_att_forward.2} parent=0 // loop_body
    %s14 = ssub.s32 %s9, 1
    %s15 = ssub.s32 %s9, 2
    %s16 = sadd.s32 %s9, 1
    %s17 = ssub.s32 %s9, %s16
    %p18 = scmp.eq.s32.totalorder %s17, 0
    %s20 = sadd.s32 %s19, 1
    %s21 = scalar_select %p18, %s19, %s20
    %p24 = pneg %p18
    %p25 = scmp.eq.s32.totalorder %s9, 1
    %p26 = por %p24, %p25
    %p27 = scmp.ne.s32.totalorder %s19, %s22
    %p28 = scmp.eq.s32.totalorder %s9, 0
    %p29 = por %p27, %p28
    %p30 = scmp.ne.s32.totalorder %s19, %s22
    %p31 = scmp.eq.s32.totalorder %s14, 1
    %p32 = por %p30, %p31
    %p33 = scmp.ne.s32.totalorder %s22, %s23
    %p34 = scmp.eq.s32.totalorder %s14, 0
    %p35 = por %p33, %p34
    %p36 = scmp.ne.s32.totalorder %s22, %s23
    %p37 = scmp.eq.s32.totalorder %s15, 1
    %p38 = por %p36, %p37
    %p40 = scmp.ne.s32.totalorder %s23, %s39
    %p41 = scmp.eq.s32.totalorder %s15, 0
    %p42 = por %p40, %p41
    %s44 = sadd.s32 %s43, 1
    %p47 = scmp.eq.s32.totalorder %s9, 1
    %p48 = scmp.ne.s32.totalorder %s43, %s45
    %p49 = scmp.eq.s32.totalorder %s9, 0
    %p50 = por %p48, %p49
    %p51 = scmp.ne.s32.totalorder %s43, %s45
    %p52 = scmp.eq.s32.totalorder %s14, 1
    %p53 = por %p51, %p52
    %p54 = scmp.ne.s32.totalorder %s45, %s46
    %p55 = scmp.eq.s32.totalorder %s14, 0
    %p56 = por %p54, %p55
    %p57 = scmp.ne.s32.totalorder %s45, %s46
    %p58 = scmp.eq.s32.totalorder %s15, 1
    %p59 = por %p57, %p58
    %p61 = scmp.ne.s32.totalorder %s46, %s60
    %p62 = scmp.eq.s32.totalorder %s15, 0
    %p63 = por %p61, %p62
    %s65 = sadd.s32 %s64, 1
    %p68 = scmp.eq.s32.totalorder %s9, 1
    %p69 = scmp.ne.s32.totalorder %s64, %s66
    %p70 = scmp.eq.s32.totalorder %s9, 0
    %p71 = por %p69, %p70
    %p72 = scmp.ne.s32.totalorder %s64, %s66
    %p73 = scmp.eq.s32.totalorder %s14, 1
    %p74 = por %p72, %p73
    %p75 = scmp.ne.s32.totalorder %s66, %s67
    %p76 = scmp.eq.s32.totalorder %s14, 0
    %p77 = por %p75, %p76
    %p78 = scmp.ne.s32.totalorder %s66, %s67
    %p79 = scmp.eq.s32.totalorder %s15, 1
    %p80 = por %p78, %p79
    %p82 = scmp.ne.s32.totalorder %s67, %s81
    %p83 = scmp.eq.s32.totalorder %s15, 0
    %p84 = por %p82, %p83
    %s85 = ssub.s32 %s9, %s16
    %p86 = scmp.eq.s32.totalorder %s85, 0
    %s88 = sadd.s32 %s87, 1
    %s89 = scalar_select %p86, %s87, %s88
    %p92 = pneg %p86
    %p93 = scmp.eq.s32.totalorder %s9, 1
    %p94 = por %p92, %p93
    %p95 = scmp.ne.s32.totalorder %s87, %s90
    %p96 = scmp.eq.s32.totalorder %s9, 0
    %p97 = por %p95, %p96
    %p98 = scmp.ne.s32.totalorder %s87, %s90
    %p99 = scmp.eq.s32.totalorder %s14, 1
    %p100 = por %p98, %p99
    %p101 = scmp.ne.s32.totalorder %s90, %s91
    %p102 = scmp.eq.s32.totalorder %s14, 0
    %p103 = por %p101, %p102
    %p104 = scmp.ne.s32.totalorder %s90, %s91
    %p105 = scmp.eq.s32.totalorder %s15, 1
    %p106 = por %p104, %p105
    %p108 = scmp.ne.s32.totalorder %s91, %s107
    %p109 = scmp.eq.s32.totalorder %s15, 0
    %p110 = por %p108, %p109
    %p111 = scmp.le.s32.totalorder 1, %s9
    %p112 = scmp.lt.s32.totalorder %s9, 3
    %p113 = pnand %p111, %p112
    %p114 = pneg %p113
    // Predicated region
    $region9: #{space_att_forward.2} parent=5 // pred_check
      _
    $region10: #{space_att_forward.2} parent=5 // pred_check_branch
      %116 = sbr.rel (%p113) target = $region12
    $region11: #{space_att_forward.2} parent=5 // pred_region
      %s117 = ssub.s32 %s9, 1
      // Predicated region
      $region13: #{space_att_forward.2} parent=11 // pred_check
        %p118 = pneg %p56
      $region14: #{space_att_forward.2} parent=11 // pred_check_branch
        %120 = sbr.rel (%p118) target = $region16
      $region15: #{space_att_forward.2} parent=11 // pred_region
        _
      $region16: #{space_att_forward.2} parent=11 // pred_fallthru
        _
      // Predicated region
      $region17: #{space_att_forward.2} parent=11 // pred_check
        %p121 = pneg %p77
      $region18: #{space_att_forward.2} parent=11 // pred_check_branch
        %123 = sbr.rel (%p121) target = $region20
      $region19: #{space_att_forward.2} parent=11 // pred_region
        _
      $region20: #{space_att_forward.2} parent=11 // pred_fallthru
        _
    $region12: #{space_att_forward.2} parent=5 // pred_fallthru
      _
    %p124 = scmp.lt.s32.totalorder %s9, 2
    // Predicated region
    $region21: #{space_att_forward.2} parent=5 // pred_check
      %p125 = pneg %p124
    $region22: #{space_att_forward.2} parent=5 // pred_check_branch
      %127 = sbr.rel (%p125) target = $region24
    $region23: #{space_att_forward.2} parent=5 // pred_region
      // Predicated region
      $region25: #{space_att_forward.2} parent=23 // pred_check
        %p128 = pneg %p29
      $region26: #{space_att_forward.2} parent=23 // pred_check_branch
        %130 = sbr.rel (%p128) target = $region28
      $region27: #{space_att_forward.2} parent=23 // pred_region
        %p131 = scmp.lt.s32.totalorder %s9, 1
        %s132 = scalar_select %p131, %s9, 1
        %s133 = smul.addr %s132, 2
        %s134 = smul.addr %s133, 4
        %s135 = scalar_lea.vmem %s0, %s134
      $region28: #{space_att_forward.2} parent=23 // pred_fallthru
        _
    $region24: #{space_att_forward.2} parent=5 // pred_fallthru
      _
    %p136 = scmp.le.s32.totalorder 1, %s9
    %p137 = scmp.lt.s32.totalorder %s9, 3
    %p138 = pnand %p136, %p137
    %p139 = pneg %p138
    // Predicated region
    $region29: #{space_att_forward.2} parent=5 // pred_check
      _
    $region30: #{space_att_forward.2} parent=5 // pred_check_branch
      %141 = sbr.rel (%p138) target = $region32
    $region31: #{space_att_forward.2} parent=5 // pred_region
      %s142 = ssub.s32 %s9, 1
      %p143 = scmp.lt.s32.totalorder %s14, 1
      %s144 = scalar_select %p143, %s14, 1
      %s145 = smul.addr %s144, 2
      %s146 = smul.addr %s145, 4
      %s147 = scalar_lea.vmem %s0, %s146
      %p148 = pneg %p35
      %p149 = pneg %p32
      %p150 = pneg %p56
      %p151 = pneg %p53
      %p152 = pneg %p77
      %p153 = pneg %p74
      %p154 = pneg %p103
      %p155 = pneg %p100
      %p156 = scmp.lt.s32.totalorder %s14, 1
      %s157 = scalar_select %p156, %s14, 1
      %s158 = smul.addr %s157, 2
      %s159 = scalar_lea.vmem %s3, %s158
      %p160 = scmp.lt.s32.totalorder %s14, 1
      %s161 = scalar_select %p160, %s14, 1
      %s162 = smul.addr %s161, 2
      %s163 = smul.addr %s162, 4
      %s164 = scalar_lea.vmem %s0, %s163
      %p165 = scmp.lt.s32.totalorder %s14, 1
      %s166 = scalar_select %p165, %s14, 1
      %s167 = smul.addr %s166, 2
      %s168 = scalar_lea.vmem %s3, %s167
      %v169 = vld [vmem:[%s164] sm:$0xff]
      %v170 = vld [vmem:[%s1] sm:$0x1f]
      %v171 = vld [vmem:[%s2] sm:$0x1f]
      %173 = vset.pattern.permute.xlu0 0
      %174 = vperm.xlu0 %173, %v171
      %v175 = vpop.permute.xlu0 %174
      %v178 = vcombine.high %v169, %v169
      %vm179 = vcmask 31744
      %v181 = vsel %vm179, %v170, 0
      %vm183 = vcmask 1043456
      %v184 = vsel %vm183, %v169, 0
      %v186 = vsel %vm183, %v178, 0
      %188 = vmatprep.subr.mxu0 0.0
      %189 = vmatpush1.msra.mxu0 0.0
      %190 = vmatprep.subr.mxu0 0.0
      %191 = vmatpush1.msra.mxu0 0.0
      %192 = vmatprep.subr.mxu0 0.0
      %193 = vmatpush1.msra.mxu0 0.0
      %194 = vmatprep.subr.mxu0 0.0
      %195 = vmatpush1.msra.mxu0 0.0
      %196 = vmatprep.subr.mxu0 0.0
      %197 = vmatpush1.msra.mxu0 0.0
      %198 = vmatprep.subr.mxu0 0.0
      %199 = vmatpush1.msra.mxu0 0.0
      %200 = vmatprep.subr.mxu0 0.0
      %201 = vmatpush1.msra.mxu0 0.0
      %202 = vmatprep.subr.mxu0 0.0
      %203 = vmatpush1.msra.mxu0 0.0
      %204 = vmatprep.subr.mxu0 0.0
      %205 = vmatpush1.msra.mxu0 0.0
      %206 = vmatprep.subr.mxu0 0.0
      %207 = vmatpush1.msra.mxu0 0.0
      %208 = vmatprep.subr.mxu0 0.0
      %209 = vmatpush1.msra.mxu0 0.0
      %210 = vmatprep.subr.mxu0 0.0
      %211 = vmatpush1.msra.mxu0 0.0
      %212 = vmatprep.subr.mxu0 0.0
      %213 = vmatpush1.msra.mxu0 0.0
      %214 = vmatprep.subr.mxu0 0.0
      %215 = vmatpush1.msra.mxu0 0.0
      %216 = vmatprep.subr.mxu0 0.0
      %217 = vmatpush1.msra.mxu0 0.0
      %218 = vmatprep.subr.mxu0 %v186
      %219 = vmatpush1.msra.mxu0 %v184
      %220 = vmatprep.subr.mxu0 0.0
      %221 = vmatpush2.msra.mxu0 0.0
      %222 = vmatprep.subr.mxu0 0.0
      %223 = vmatpush2.msra.mxu0 0.0
      %224 = vmatprep.subr.mxu0 0.0
      %225 = vmatpush2.msra.mxu0 0.0
      %226 = vmatprep.subr.mxu0 0.0
      %227 = vmatpush2.msra.mxu0 0.0
      %228 = vmatprep.subr.mxu0 0.0
      %229 = vmatpush2.msra.mxu0 0.0
      %230 = vmatprep.subr.mxu0 0.0
      %231 = vmatpush2.msra.mxu0 0.0
      %232 = vmatprep.subr.mxu0 0.0
      %233 = vmatpush2.msra.mxu0 0.0
      %234 = vmatprep.subr.mxu0 0.0
      %235 = vmatpush2.msra.mxu0 0.0
      %236 = vmatprep.subr.mxu0 0.0
      %237 = vmatpush2.msra.mxu0 0.0
      %238 = vmatprep.subr.mxu0 0.0
      %239 = vmatpush2.msra.mxu0 0.0
      %240 = vmatprep.subr.mxu0 0.0
      %241 = vmatpush2.msra.mxu0 0.0
      %242 = vmatprep.subr.mxu0 0.0
      %243 = vmatpush2.msra.mxu0 0.0
      %244 = vmatprep.subr.mxu0 0.0
      %245 = vmatpush2.msra.mxu0 0.0
      %246 = vmatprep.subr.mxu0 0.0
      %247 = vmatpush2.msra.mxu0 0.0
      %248 = vmatprep.subr.mxu0 0.0
      %249 = vmatpush2.msra.mxu0 0.0
      %250 = vmatprep.subr.mxu0 0.0
      %251 = vmatpush2.msra.mxu0 0.0
      %252 = vmatprep.mubr.f32.mxu0 0.0
      %253 = vmatmul.mubr.f32.gmra.mxu0 %v181
      %v254 = vpop.f32.mrf.mxu0
      %v255 = vadd.f32 %v175, %v254
      %v256 = vpop.f32.mrf.mxu0
      %v257 = vadd.f32 %v175, %v256
      %258 = vdwg.mxu0
      %vm259 = vcmask 1044484
      %v260 = vsel %vm259, %v255, -inf
      %v261 = vsel %vm259, %v257, -inf
      %v262 = vmax.f32 %v260, %v261
      %263 = vmax.xlane.f32.xlu0 %v262
      %v264 = vpop.xlane.xlu0 %263
      %v265 = vsub.f32 %v255, %v264
      %v266 = vsub.f32 %v257, %v264
      %v267 = vmul.f32 %v265, 1.442695
      %v268 = vpow.pop %v267
      %v269 = vmul.f32 %v266, 1.442695
      %v270 = vpow.pop %v269
      %v271 = vsel %vm259, %v268, 0.0
      %v272 = vsel %vm259, %v270, 0.0
      %v273 = vadd.f32 %v271, %v272
      %274 = vadd.xlane.f32.xlu0 %v273
      %v275 = vpop.xlane.xlu0 %274
      %v276 = vrcp.pop %v275
      %v277 = vmul.f32 %v268, %v276
      %v278 = vmul.f32 %v270, %v276
      %v279 = vlaneseq
      %v280 = vshrl.u32 %v279, 7
      %v281 = vsub.s32 4, %v280
      %v282 = vrot.slane %v277, %v281
      %v283 = vlaneseq
      %v284 = vshrl.u32 %v283, 7
      %v285 = vsub.s32 4, %v284
      %v286 = vrot.slane %v278, %v285
      %v289 = vcombine.low %v282, %v286
      %v291 = vmul.f32 %v169, %v289
      %v293 = vcombine.high %v291, %v291
      %v295 = vsel %vm183, %v291, 0.0
      %v296 = vsel %vm183, %v293, 0.0
      %v297 = vadd.f32 %v295, %v296
      %298 = vadd.xlane.f32.xlu0 %v297
      %v299 = vpop.xlane.xlu0 %298
      %v300 = vmul.f32 %v255, %v299
      %v301 = vmul.f32 %v257, %v299
      %v302 = vsel %vm183, %v300, 0.0
      %v303 = vrot.slane %v302, 4
      %v304 = vadd.f32 %v302, %v303
      %v305 = vrot.slane %v304, 2
      %v306 = vadd.f32 %v304, %v305
      %v307 = vrot.slane %v306, 1
      %v308 = vadd.f32 %v306, %v307
      %v309 = vsel %vm183, %v301, 0.0
      %v310 = vrot.slane %v309, 4
      %v311 = vadd.f32 %v309, %v310
      %v312 = vrot.slane %v311, 2
      %v313 = vadd.f32 %v311, %v312
      %v314 = vrot.slane %v313, 1
      %v315 = vadd.f32 %v313, %v314
      %v318 = vcombine.low %v308, %v315
      %v320 = vunpack.c.l.s4 1966171168
      %v321 = vunpack.c.0.s8 %v320
      %v322 = vlaneseq
      %v323 = vshrl.u32 %v322, 7
      %v324 = vsub.s32 %v321, %v323
      %v325 = vrot.slane %v318, %v324
      %v327 = vunpack.c.l.s4 1966171168
      %v328 = vunpack.c.0.s8 %v327
      %v329 = vlaneseq
      %v330 = vshrl.u32 %v329, 7
      %v331 = vsub.s32 %v328, %v330
      %v332 = vrot.slane %v325, %v331
      %v334 = vlaneseq
      %vm335 = vcmp.ge.s32.totalorder %v334, 0
      %vm336 = vcmp.lt.s32.totalorder %v334, 256
      %vm337 = vmand %vm335, %vm336
      %338 = vst.msk [vmem:[%s168] sm:$0x3] %vm337, %v332
      %p339 = scmp.lt.s32.totalorder %s14, 1
      %s340 = scalar_select %p339, %s14, 1
      %s341 = smul.addr %s340, 2
      %s342 = scalar_lea.vmem %s3, %s341
      // Predicated region
      $region33: #{space_att_forward.2} parent=31 // pred_check
        %p343 = pneg %p100
      $region34: #{space_att_forward.2} parent=31 // pred_check_branch
        %345 = sbr.rel (%p343) target = $region36
      $region35: #{space_att_forward.2} parent=31 // pred_region
        _
      $region36: #{space_att_forward.2} parent=31 // pred_fallthru
        _
    $region32: #{space_att_forward.2} parent=5 // pred_fallthru
      _
    %p346 = scmp.le.s32.totalorder 2, %s9
    // Predicated region
    $region37: #{space_att_forward.2} parent=5 // pred_check
      %p347 = pneg %p346
    $region38: #{space_att_forward.2} parent=5 // pred_check_branch
      %349 = sbr.rel (%p347) target = $region40
    $region39: #{space_att_forward.2} parent=5 // pred_region
      %s350 = ssub.s32 %s9, 2
      // Predicated region
      $region41: #{space_att_forward.2} parent=39 // pred_check
        %p351 = pneg %p106
      $region42: #{space_att_forward.2} parent=39 // pred_check_branch
        %353 = sbr.rel (%p351) target = $region44
      $region43: #{space_att_forward.2} parent=39 // pred_region
        %p354 = scmp.lt.s32.totalorder %s15, 1
        %s355 = scalar_select %p354, %s15, 1
        %s356 = smul.addr %s355, 2
        %s357 = scalar_lea.vmem %s3, %s356
      $region44: #{space_att_forward.2} parent=39 // pred_fallthru
        _
    $region40: #{space_att_forward.2} parent=5 // pred_fallthru
      _
  $region6: #{space_att_forward.2} parent=0 // loop_footer
    %s13 = sadd.s32 1, %s9
  $region7: #{space_att_forward.2} parent=0 // loop_footer_branch
    %8 = sbr.rel target = $region3
  $region8: #{space_att_forward.2} parent=0 // loop_exit
    _

</llo_original>
